<compile_context>
chip_gen: v5e
topology: v5e:2x2
jax: 0.10.0
libtpu: 0.0.40
codegen_flags: <defaults>
</compile_context>

<pallas_src>
import jax
import jax.numpy as jnp
from jax.experimental import pallas as pl
from jax.experimental.pallas import tpu as pltpu


def _round_up(v, m):
    return ((v + m - 1) // m) * m


def _linear_kernel(x_ref, w_ref, b_ref, o_ref):
    # x_ref: (TM, Kp) bf16   w_ref: (Kp, Np) bf16
    # b_ref: (1, Np)  f32    o_ref: (TM, Np) f32
    acc = jnp.dot(x_ref[...], w_ref[...], preferred_element_type=jnp.float32)
    o_ref[...] = (acc + b_ref[...]).astype(o_ref.dtype)


def decoder_forward(x, weight, bias, *, tile_m=512):
    """Pallas implementation of Decoder.forward: x @ weight.T + bias.

    x:      (M, K) float32
    weight: (N, K) float32   (nn.Linear weight layout)
    bias:   (N,)   float32
    returns (M, N) float32
    """
    M, K = x.shape
    N, K2 = weight.shape
    assert K == K2 and bias.shape == (N,)

    # --- layout / padding ---------------------------------------------------
    # Lane-dense output: pad N up to a multiple of 128 (unmasked vst).
    N_pad = _round_up(N, 128)
    # Contraction dim padded to the bf16 sublane pack (16) for aligned layout.
    K_pad = _round_up(K, 16)
    # Tile M and pad ragged batches instead of asserting divisibility.
    tile_m = max(8, min(tile_m, _round_up(M, 8)))
    M_pad = _round_up(M, tile_m)

    # bf16 inputs halve HBM traffic and double MXU throughput; f32 accumulate.
    x_p = jnp.zeros((M_pad, K_pad), jnp.bfloat16).at[:M, :K].set(
        x.astype(jnp.bfloat16))
    w_p = jnp.zeros((K_pad, N_pad), jnp.bfloat16).at[:K, :N].set(
        weight.T.astype(jnp.bfloat16))
    b_p = jnp.zeros((1, N_pad), jnp.float32).at[0, :N].set(
        bias.astype(jnp.float32))

    grid = (M_pad // tile_m,)

    # VMEM budget: double-buffered x/out tiles + resident w/b + headroom.
    vmem_bytes = (2 * tile_m * K_pad * 2          # x tiles (bf16)
                  + 2 * tile_m * N_pad * 4        # out tiles (f32)
                  + 2 * K_pad * N_pad * 2         # weight (bf16)
                  + 2 * N_pad * 4                 # bias (f32)
                  + (4 << 20))                    # headroom
    vmem_bytes = int(min(max(vmem_bytes, 8 << 20), 64 << 20))

    cost = pl.CostEstimate(
        flops=2 * M_pad * K_pad * N_pad,
        transcendentals=0,
        bytes_accessed=(M_pad * K_pad * 2 + K_pad * N_pad * 2
                        + N_pad * 4 + M_pad * N_pad * 4),
    )

    out_padded = pl.pallas_call(
        _linear_kernel,
        out_shape=jax.ShapeDtypeStruct((M_pad, N_pad), jnp.float32),
        grid_spec=pltpu.PrefetchScalarGridSpec(
            num_scalar_prefetch=0,
            grid=grid,
            in_specs=[
                pl.BlockSpec((tile_m, K_pad), lambda i: (i, 0)),
                pl.BlockSpec((K_pad, N_pad), lambda i: (0, 0)),
                pl.BlockSpec((1, N_pad), lambda i: (0, 0)),
            ],
            out_specs=pl.BlockSpec((tile_m, N_pad), lambda i: (i, 0)),
        ),
        compiler_params=pltpu.CompilerParams(
            dimension_semantics=("parallel",),
            vmem_limit_bytes=vmem_bytes,
        ),
        cost_estimate=cost,
    )(x_p, w_p, b_p)

    # Slice padding back off.
    return out_padded[:M, :N]


if __name__ == "__main__":
    # Small shapes consistent with Decoder(embed_size, num_inputs).
    # batch=256 with tile_m=128 gives a 2-step grid so pipelining / megacore
    # sharding is actually exercised while staying small.
    batch, embed_size, num_inputs = 256, 32, 64

    key = jax.random.PRNGKey(0)
    kx, kw, kb = jax.random.split(key, 3)

    # nn.Linear parameters: weight (num_inputs, embed_size), bias (num_inputs,)
    x = jax.random.normal(kx, (batch, embed_size), dtype=jnp.float32)
    weight = jax.random.normal(kw, (num_inputs, embed_size), dtype=jnp.float32) * 0.05
    bias = jax.random.normal(kb, (num_inputs,), dtype=jnp.float32) * 0.01

    out = decoder_forward(x, weight, bias, tile_m=128)
    out = jax.block_until_ready(out)

    # Reference check against plain JAX (same semantics as torch nn.Linear).
    # Tolerance loosened for bf16 input casting (f32 accumulation).
    ref = x @ weight.T + bias[None, :]
    assert out.shape == (batch, num_inputs)
    assert jnp.allclose(out, ref, atol=3e-2, rtol=3e-2)

    print("KERNEL_OK")
</pallas_src>

<mosaic_0001>
module attributes {stable_mosaic.version = 11 : i64} {
  func.func @_linear_kernel(%arg0: i32, %arg1: memref<128x32xbf16, #tpu.memory_space<vmem>>, %arg2: memref<32x128xbf16, #tpu.memory_space<vmem>>, %arg3: memref<1x128xf32, #tpu.memory_space<vmem>>, %arg4: memref<128x128xf32, #tpu.memory_space<vmem>>) attributes {dimension_semantics = [#tpu.dimension_semantics<parallel>], iteration_bounds = array<i64: 2>, scalar_prefetch = 0 : i64, scratch_operands = 0 : i64, tpu.core_type = #tpu.core_type<tc>, window_params = [{transform_indices = @transform_0, window_bounds = array<i64: 128, 32>}, {pipeline_mode = #tpu.pipeline_mode<synchronous>, transform_indices = @transform_1, window_bounds = array<i64: 32, 128>}, {pipeline_mode = #tpu.pipeline_mode<synchronous>, transform_indices = @transform_2, window_bounds = array<i64: 1, 128>}, {transform_indices = @transform_3, window_bounds = array<i64: 128, 128>}]} {
    %c0 = arith.constant 0 : index
    %c0_0 = arith.constant 0 : index
    %0 = vector.load %arg1[%c0, %c0_0] : memref<128x32xbf16, #tpu.memory_space<vmem>>, vector<128x32xbf16>
    %c0_1 = arith.constant 0 : index
    %c0_2 = arith.constant 0 : index
    %1 = vector.load %arg2[%c0_1, %c0_2] : memref<32x128xbf16, #tpu.memory_space<vmem>>, vector<32x128xbf16>
    %cst = arith.constant dense<0.000000e+00> : vector<128x128xf32>
    %2 = tpu.matmul %0, %1, %cst {dimension_numbers = #tpu.dot_dimension_numbers<[1], [0], [0], [1], [0, 0, 1, 1], [], []>} : vector<128x32xbf16>, vector<32x128xbf16>, vector<128x128xf32> -> vector<128x128xf32>
    %c0_3 = arith.constant 0 : index
    %c0_4 = arith.constant 0 : index
    %3 = vector.load %arg3[%c0_3, %c0_4] : memref<1x128xf32, #tpu.memory_space<vmem>>, vector<1x128xf32>
    %4 = vector.broadcast %3 : vector<1x128xf32> to vector<128x128xf32>
    %5 = arith.addf %2, %4 : vector<128x128xf32>
    %c0_5 = arith.constant 0 : index
    %c0_6 = arith.constant 0 : index
    %6 = vector.load %arg4[%c0_5, %c0_6] : memref<128x128xf32, #tpu.memory_space<vmem>>, vector<128x128xf32>
    tpu.vector_store %arg4[%c0_5, %c0_6], %5 {strides = array<i32>} : memref<128x128xf32, #tpu.memory_space<vmem>>, vector<128x128xf32>,
    return
  }
  func.func @transform_0(%arg0: i32) -> (i32, i32) {
    %c0_i32 = arith.constant 0 : i32
    %c0_i32_0 = arith.constant 0 : i32
    return %arg0, %c0_i32 : i32, i32
  }
  func.func @transform_1(%arg0: i32) -> (i32, i32) {
    %c0_i32 = arith.constant 0 : i32
    %c0_i32_0 = arith.constant 0 : i32
    %c0_i32_1 = arith.constant 0 : i32
    return %c0_i32, %c0_i32_0 : i32, i32
  }
  func.func @transform_2(%arg0: i32) -> (i32, i32) {
    %c0_i32 = arith.constant 0 : i32
    %c0_i32_0 = arith.constant 0 : i32
    %c0_i32_1 = arith.constant 0 : i32
    return %c0_i32, %c0_i32_0 : i32, i32
  }
  func.func @transform_3(%arg0: i32) -> (i32, i32) {
    %c0_i32 = arith.constant 0 : i32
    %c0_i32_0 = arith.constant 0 : i32
    return %arg0, %c0_i32 : i32, i32
  }
}

</mosaic_0001>

<llo_original>
// kernel: tpu_custom_call.1
$region0: #{tpu_custom_call.1}
  #allocation0 [shape = 'u32[]', space=smem, size = 0x4, offset = 0x4, fixed_abs, tag = 'smem constant byte address 0x4 - core index']
  #allocation1 [shape = 'u32[72,128]{1,0:T(1,128)}', space=vmem, size = 0x9000, scoped, tag = 'internal scratch']
  %s0 = inlined_call_operand.vmem [shape: bf16[256,32], index: 0, kind: input, shape index: {}]
  %s1 = inlined_call_operand.vmem [shape: bf16[32,128], index: 1, kind: input, shape index: {}]
  %s2 = inlined_call_operand.vmem [shape: f32[1,128], index: 2, kind: input, shape index: {}]
  %s3 = inlined_call_operand.hbm [shape: f32[256,128], index: 3, kind: output, shape index: {}]
  %s4 = sld [smem:[#allocation0]]
  $region45: #{tpu_custom_call.1} parent=0
    _
  %s6 = ssub.s32 1, %s4
  %s7 = scalar_select 0, %s6, %s4
  $region1: #{tpu_custom_call.1} parent=0
    #allocation2 [shape = 'u8[131072]{0}', space=vmem, size = 0x20000, scoped, tag = 'output window, operand 0']
    #allocation3 [shape = 's32[2]{0}', space=sflag, size = 0x8, scoped, tag = 'scoped memory for tpu_custom_call.1']
    %8 = vsyncpa [#allocation3], 0
    %s9 = scalar_lea.sflag [#allocation3], 1
    %10 = vsyncpa %s9, 0
    loop: start=0, step=1, limit=4
    $region2: #{tpu_custom_call.1} parent=1 // loop_pre_header
      _
    $region3: #{tpu_custom_call.1} parent=1 // loop_header
      %s12 = sphi 0, %s16
      %p13 = scmp.ge.s32.totalorder %s12, 4
      %s22 = sphi 0, %s24
      %s25 = sphi 0, %s22
      %s26 = sphi 0, %s25
      %s42 = sphi 0, %s26
      %s46 = sphi 0, %s46
      %s48 = sphi 0, %s46
      %s49 = sphi 0, %s48
      %s63 = sphi 0, %s49
      %s67 = sphi 0, %s67
      %s69 = sphi 0, %s67
      %s70 = sphi 0, %s69
      %s84 = sphi 0, %s70
      %s90 = sphi 0, %s92
      %s93 = sphi 0, %s90
      %s94 = sphi 0, %s93
      %s110 = sphi 0, %s94
    $region4: #{tpu_custom_call.1} parent=1 // loop_header_branch
      %15 = sbr.rel (%p13) target = $region8
    $region5: #{tpu_custom_call.1} parent=1 // loop_body
      %s17 = ssub.s32 %s12, 1
      %s18 = ssub.s32 %s12, 2
      %s19 = sadd.s32 %s12, 1
      %s20 = ssub.s32 %s12, %s19
      %p21 = scmp.eq.s32.totalorder %s20, 0
      %s23 = sadd.s32 %s22, 1
      %s24 = scalar_select %p21, %s22, %s23
      %p27 = pneg %p21
      %p28 = scmp.eq.s32.totalorder %s12, 1
      %p29 = por %p27, %p28
      %p30 = scmp.ne.s32.totalorder %s22, %s25
      %p31 = scmp.eq.s32.totalorder %s12, 0
      %p32 = por %p30, %p31
      %p33 = scmp.ne.s32.totalorder %s22, %s25
      %p34 = scmp.eq.s32.totalorder %s17, 1
      %p35 = por %p33, %p34
      %p36 = scmp.ne.s32.totalorder %s25, %s26
      %p37 = scmp.eq.s32.totalorder %s17, 0
      %p38 = por %p36, %p37
      %p39 = scmp.ne.s32.totalorder %s25, %s26
      %p40 = scmp.eq.s32.totalorder %s18, 1
      %p41 = por %p39, %p40
      %p43 = scmp.ne.s32.totalorder %s26, %s42
      %p44 = scmp.eq.s32.totalorder %s18, 0
      %p45 = por %p43, %p44
      %s47 = sadd.s32 %s46, 1
      %p50 = scmp.eq.s32.totalorder %s12, 1
      %p51 = scmp.ne.s32.totalorder %s46, %s48
      %p52 = scmp.eq.s32.totalorder %s12, 0
      %p53 = por %p51, %p52
      %p54 = scmp.ne.s32.totalorder %s46, %s48
      %p55 = scmp.eq.s32.totalorder %s17, 1
      %p56 = por %p54, %p55
      %p57 = scmp.ne.s32.totalorder %s48, %s49
      %p58 = scmp.eq.s32.totalorder %s17, 0
      %p59 = por %p57, %p58
      %p60 = scmp.ne.s32.totalorder %s48, %s49
      %p61 = scmp.eq.s32.totalorder %s18, 1
      %p62 = por %p60, %p61
      %p64 = scmp.ne.s32.totalorder %s49, %s63
      %p65 = scmp.eq.s32.totalorder %s18, 0
      %p66 = por %p64, %p65
      %s68 = sadd.s32 %s67, 1
      %p71 = scmp.eq.s32.totalorder %s12, 1
      %p72 = scmp.ne.s32.totalorder %s67, %s69
      %p73 = scmp.eq.s32.totalorder %s12, 0
      %p74 = por %p72, %p73
      %p75 = scmp.ne.s32.totalorder %s67, %s69
      %p76 = scmp.eq.s32.totalorder %s17, 1
      %p77 = por %p75, %p76
      %p78 = scmp.ne.s32.totalorder %s69, %s70
      %p79 = scmp.eq.s32.totalorder %s17, 0
      %p80 = por %p78, %p79
      %p81 = scmp.ne.s32.totalorder %s69, %s70
      %p82 = scmp.eq.s32.totalorder %s18, 1
      %p83 = por %p81, %p82
      %p85 = scmp.ne.s32.totalorder %s70, %s84
      %p86 = scmp.eq.s32.totalorder %s18, 0
      %p87 = por %p85, %p86
      %s88 = ssub.s32 %s12, %s19
      %p89 = scmp.eq.s32.totalorder %s88, 0
      %s91 = sadd.s32 %s90, 1
      %s92 = scalar_select %p89, %s90, %s91
      %p95 = pneg %p89
      %p96 = scmp.eq.s32.totalorder %s12, 1
      %p97 = por %p95, %p96
      %p98 = scmp.ne.s32.totalorder %s90, %s93
      %p99 = scmp.eq.s32.totalorder %s12, 0
      %p100 = por %p98, %p99
      %p101 = scmp.ne.s32.totalorder %s90, %s93
      %p102 = scmp.eq.s32.totalorder %s17, 1
      %p103 = por %p101, %p102
      %p104 = scmp.ne.s32.totalorder %s93, %s94
      %p105 = scmp.eq.s32.totalorder %s17, 0
      %p106 = por %p104, %p105
      %p107 = scmp.ne.s32.totalorder %s93, %s94
      %p108 = scmp.eq.s32.totalorder %s18, 1
      %p109 = por %p107, %p108
      %p111 = scmp.ne.s32.totalorder %s94, %s110
      %p112 = scmp.eq.s32.totalorder %s18, 0
      %p113 = por %p111, %p112
      %p114 = scmp.le.s32.totalorder 1, %s12
      %p115 = scmp.lt.s32.totalorder %s12, 3
      %p116 = pnand %p114, %p115
      %p117 = pneg %p116
      // Predicated region
      $region9: #{tpu_custom_call.1} parent=5 // pred_check
        _
      $region10: #{tpu_custom_call.1} parent=5 // pred_check_branch
        %119 = sbr.rel (%p116) target = $region12
      $region11: #{tpu_custom_call.1} parent=5 // pred_region
        %s120 = ssub.s32 %s12, 1
        // Predicated region
        $region13: #{tpu_custom_call.1} parent=11 // pred_check
          %p121 = pneg %p59
        $region14: #{tpu_custom_call.1} parent=11 // pred_check_branch
          %123 = sbr.rel (%p121) target = $region16
        $region15: #{tpu_custom_call.1} parent=11 // pred_region
          _
        $region16: #{tpu_custom_call.1} parent=11 // pred_fallthru
          _
        // Predicated region
        $region17: #{tpu_custom_call.1} parent=11 // pred_check
          %p124 = pneg %p80
        $region18: #{tpu_custom_call.1} parent=11 // pred_check_branch
          %126 = sbr.rel (%p124) target = $region20
        $region19: #{tpu_custom_call.1} parent=11 // pred_region
          _
        $region20: #{tpu_custom_call.1} parent=11 // pred_fallthru
          _
      $region12: #{tpu_custom_call.1} parent=5 // pred_fallthru
        _
      %p127 = scmp.lt.s32.totalorder %s12, 2
      // Predicated region
      $region21: #{tpu_custom_call.1} parent=5 // pred_check
        %p128 = pneg %p127
      $region22: #{tpu_custom_call.1} parent=5 // pred_check_branch
        %130 = sbr.rel (%p128) target = $region24
      $region23: #{tpu_custom_call.1} parent=5 // pred_region
        // Predicated region
        $region25: #{tpu_custom_call.1} parent=23 // pred_check
          %p131 = pneg %p32
        $region26: #{tpu_custom_call.1} parent=23 // pred_check_branch
          %133 = sbr.rel (%p131) target = $region28
        $region27: #{tpu_custom_call.1} parent=23 // pred_region
          %s134 = smul.u32 16, %s12
          %p135 = scmp.lt.s32.totalorder %s134, 31
          %s136 = scalar_select %p135, %s134, 31
          %s137 = smul.addr %s136, 4
          %s138 = scalar_lea.vmem %s0, %s137
          %s139 = smul.u32 16, %s12
        $region28: #{tpu_custom_call.1} parent=23 // pred_fallthru
          _
      $region24: #{tpu_custom_call.1} parent=5 // pred_fallthru
        _
      %p140 = scmp.le.s32.totalorder 1, %s12
      %p141 = scmp.lt.s32.totalorder %s12, 3
      %p142 = pnand %p140, %p141
      %p143 = pneg %p142
      // Predicated region
      $region29: #{tpu_custom_call.1} parent=5 // pred_check
        _
      $region30: #{tpu_custom_call.1} parent=5 // pred_check_branch
        %145 = sbr.rel (%p142) target = $region32
      $region31: #{tpu_custom_call.1} parent=5 // pred_region
        %s146 = ssub.s32 %s12, 1
        %s147 = smul.u32 16, %s17
        %p148 = scmp.lt.s32.totalorder %s147, 31
        %s149 = scalar_select %p148, %s147, 31
        %s150 = smul.addr %s149, 4
        %s151 = scalar_lea.vmem %s0, %s150
        %p152 = pneg %p38
        %p153 = pneg %p35
        %p154 = pneg %p59
        %p155 = pneg %p56
        %p156 = pneg %p80
        %p157 = pneg %p77
        %p158 = pneg %p106
        %p159 = pneg %p103
        %s160 = sand.u32 %s93, 1
        %s161 = scalar_lea.sflag [#allocation3], %s160
        %s162 = sand.u32 %s93, 1
        %s163 = smul.addr %s162, 128
        %s164 = scalar_lea.vmem [#allocation2], %s163
        %s165 = smul.u32 16, %s17
        %p166 = scmp.lt.s32.totalorder %s165, 31
        %s167 = scalar_select %p166, %s165, 31
        %s168 = smul.addr %s167, 4
        %s169 = scalar_lea.vmem %s0, %s168
        %s170 = smul.u32 16, %s17
        %s171 = smul.u32 16, %s17
        %v173 = vld [vmem:[%s169] sm:$0xf]
        %v174 = vld [vmem:[%s169 + $0x4] sm:$0xf]
        %v175 = vld [vmem:[%s169 + $0x8] sm:$0xf]
        %v176 = vld [vmem:[%s169 + $0xc] sm:$0xf]
        %v177 = vld [vmem:[%s169 + $0x10] sm:$0xf]
        %v178 = vld [vmem:[%s169 + $0x14] sm:$0xf]
        %v179 = vld [vmem:[%s169 + $0x18] sm:$0xf]
        %v180 = vld [vmem:[%s169 + $0x1c] sm:$0xf]
        %v181 = vld [vmem:[%s169 + $0x20] sm:$0xf]
        %v182 = vld [vmem:[%s169 + $0x24] sm:$0xf]
        %v183 = vld [vmem:[%s169 + $0x28] sm:$0xf]
        %v184 = vld [vmem:[%s169 + $0x2c] sm:$0xf]
        %v185 = vld [vmem:[%s169 + $0x30] sm:$0xf]
        %v186 = vld [vmem:[%s169 + $0x34] sm:$0xf]
        %v187 = vld [vmem:[%s169 + $0x38] sm:$0xf]
        %v188 = vld [vmem:[%s169 + $0x3c] sm:$0xf]
        %v189 = vld [vmem:[%s1] sm:$0xf]
        %v190 = vld [vmem:[%s1 + $0x4] sm:$0xf]
        %v191 = vld [vmem:[%s1 + $0x8] sm:$0xf]
        %v192 = vld [vmem:[%s1 + $0xc] sm:$0xf]
        %v193 = vld [vmem:[%s2] sm:$0x1]
        %v195 = vperm.slane %v193, 0
        %v213 = vunpack.c.l.b16 %v173
        %v214 = vunpack.c.l.b16 %v174
        %v215 = vunpack.c.l.b16 %v175
        %v216 = vunpack.c.l.b16 %v176
        %v217 = vunpack.c.l.b16 %v177
        %v218 = vunpack.c.l.b16 %v178
        %v219 = vunpack.c.l.b16 %v179
        %v220 = vunpack.c.l.b16 %v180
        %v221 = vunpack.c.l.b16 %v181
        %v222 = vunpack.c.l.b16 %v182
        %v223 = vunpack.c.l.b16 %v183
        %v224 = vunpack.c.l.b16 %v184
        %v225 = vunpack.c.l.b16 %v185
        %v226 = vunpack.c.l.b16 %v186
        %v227 = vunpack.c.l.b16 %v187
        %v228 = vunpack.c.l.b16 %v188
        %v229 = vpack.c.b16 %v214, %v213
        %v230 = vpack.c.b16 %v216, %v215
        %v231 = vpack.c.b16 %v218, %v217
        %v232 = vpack.c.b16 %v220, %v219
        %v233 = vpack.c.b16 %v222, %v221
        %v234 = vpack.c.b16 %v224, %v223
        %v235 = vpack.c.b16 %v226, %v225
        %v236 = vpack.c.b16 %v228, %v227
        %v241 = vunpack.c.l.b16 %v189
        %v242 = vunpack.c.l.b16 %v190
        %v243 = vunpack.c.l.b16 %v191
        %v244 = vunpack.c.l.b16 %v192
        %v245 = vpack.c.b16 %v242, %v241
        %v246 = vpack.c.b16 %v244, %v243
        %vm249 = vcmask 261120
        %v251 = vsel %vm249, %v229, 0
        %v254 = vsel %vm249, %v230, 0
        %v257 = vsel %vm249, %v231, 0
        %v260 = vsel %vm249, %v232, 0
        %v263 = vsel %vm249, %v233, 0
        %v266 = vsel %vm249, %v234, 0
        %v269 = vsel %vm249, %v235, 0
        %v272 = vsel %vm249, %v236, 0
        %274 = vmatpush.bf16.msra.mxu0 0
        %275 = vmatpush.bf16.msra.mxu0 0
        %276 = vmatpush.bf16.msra.mxu0 0
        %277 = vmatpush.bf16.msra.mxu0 0
        %278 = vmatpush.bf16.msra.mxu0 0
        %279 = vmatpush.bf16.msra.mxu0 0
        %280 = vmatpush.bf16.msra.mxu0 %v246
        %281 = vmatpush.bf16.msra.mxu0 %v245
        %282 = vmatmul.bf16.gmra.mxu0 %v251
        %v283 = vpop.f32.mrf.mxu0
        %v284 = vadd.f32 %v195, %v283
        %v285 = vpop.f32.mrf.mxu0
        %v286 = vadd.f32 %v195, %v285
        %287 = vmatmul.bf16.gmra.mxu0 %v254
        %v288 = vpop.f32.mrf.mxu0
        %v289 = vadd.f32 %v195, %v288
        %v290 = vpop.f32.mrf.mxu0
        %v291 = vadd.f32 %v195, %v290
        %292 = vmatmul.bf16.gmra.mxu0 %v257
        %v293 = vpop.f32.mrf.mxu0
        %v294 = vadd.f32 %v195, %v293
        %v295 = vpop.f32.mrf.mxu0
        %v296 = vadd.f32 %v195, %v295
        %297 = vmatmul.bf16.gmra.mxu0 %v260
        %v298 = vpop.f32.mrf.mxu0
        %v299 = vadd.f32 %v195, %v298
        %v300 = vpop.f32.mrf.mxu0
        %v301 = vadd.f32 %v195, %v300
        %302 = vmatmul.bf16.gmra.mxu0 %v263
        %v303 = vpop.f32.mrf.mxu0
        %v304 = vadd.f32 %v195, %v303
        %v305 = vpop.f32.mrf.mxu0
        %v306 = vadd.f32 %v195, %v305
        %307 = vmatmul.bf16.gmra.mxu0 %v266
        %v308 = vpop.f32.mrf.mxu0
        %v309 = vadd.f32 %v195, %v308
        %v310 = vpop.f32.mrf.mxu0
        %v311 = vadd.f32 %v195, %v310
        %312 = vmatmul.bf16.gmra.mxu0 %v269
        %v313 = vpop.f32.mrf.mxu0
        %v314 = vadd.f32 %v195, %v313
        %v315 = vpop.f32.mrf.mxu0
        %v316 = vadd.f32 %v195, %v315
        %317 = vmatmul.bf16.gmra.mxu0 %v272
        %v318 = vpop.f32.mrf.mxu0
        %v319 = vadd.f32 %v195, %v318
        %v320 = vpop.f32.mrf.mxu0
        %v321 = vadd.f32 %v195, %v320
        %322 = vdwg.mxu0
        %323 = vst [vmem:[%s164] sm:$0xff] %v284
        %324 = vst [vmem:[%s164 + $0x8] sm:$0xff] %v286
        %325 = vst [vmem:[%s164 + $0x10] sm:$0xff] %v289
        %326 = vst [vmem:[%s164 + $0x18] sm:$0xff] %v291
        %327 = vst [vmem:[%s164 + $0x20] sm:$0xff] %v294
        %328 = vst [vmem:[%s164 + $0x28] sm:$0xff] %v296
        %329 = vst [vmem:[%s164 + $0x30] sm:$0xff] %v299
        %330 = vst [vmem:[%s164 + $0x38] sm:$0xff] %v301
        %331 = vst [vmem:[%s164 + $0x40] sm:$0xff] %v304
        %332 = vst [vmem:[%s164 + $0x48] sm:$0xff] %v306
        %333 = vst [vmem:[%s164 + $0x50] sm:$0xff] %v309
        %334 = vst [vmem:[%s164 + $0x58] sm:$0xff] %v311
        %335 = vst [vmem:[%s164 + $0x60] sm:$0xff] %v314
        %336 = vst [vmem:[%s164 + $0x68] sm:$0xff] %v316
        %337 = vst [vmem:[%s164 + $0x70] sm:$0xff] %v319
        %338 = vst [vmem:[%s164 + $0x78] sm:$0xff] %v321
        %s339 = sand.u32 %s93, 1
        %s340 = scalar_lea.sflag [#allocation3], %s339
        %s341 = sand.u32 %s93, 1
        %s342 = smul.addr %s341, 128
        %s343 = scalar_lea.vmem [#allocation2], %s342
        // Predicated region
        $region33: #{tpu_custom_call.1} parent=31 // pred_check
          %p344 = pneg %p103
        $region34: #{tpu_custom_call.1} parent=31 // pred_check_branch
          %346 = sbr.rel (%p344) target = $region36
        $region35: #{tpu_custom_call.1} parent=31 // pred_region
          %s347 = smul.u32 16, %s17
          %349 = vsyncadd %s340, 0
          %s350 = smul.addr %s347, 8
          %s351 = scalar_lea.hbm %s3, %s350
          %s352 = sshll.u32 %s343, 4
          %s353 = int_to_ptr.vmem [resolvable:$true] %s352
          %s354 = sshll.u32 %s351, 4
          %s355 = int_to_ptr.hbm [resolvable:$true] %s354
          %360 = dma.vmem_to_hbm [thread:$0]  %s353, 2048, %s355, %s340, 128, 128, 8
        $region36: #{tpu_custom_call.1} parent=31 // pred_fallthru
          _
      $region32: #{tpu_custom_call.1} parent=5 // pred_fallthru
        _
      %p361 = scmp.le.s32.totalorder 2, %s12
      // Predicated region
      $region37: #{tpu_custom_call.1} parent=5 // pred_check
        %p362 = pneg %p361
      $region38: #{tpu_custom_call.1} parent=5 // pred_check_branch
        %364 = sbr.rel (%p362) target = $region40
      $region39: #{tpu_custom_call.1} parent=5 // pred_region
        %s365 = ssub.s32 %s12, 2
        // Predicated region
        $region41: #{tpu_custom_call.1} parent=39 // pred_check
          %p366 = pneg %p109
        $region42: #{tpu_custom_call.1} parent=39 // pred_check_branch
          %368 = sbr.rel (%p366) target = $region44
        $region43: #{tpu_custom_call.1} parent=39 // pred_region
          %s369 = sand.u32 %s94, 1
          %s370 = scalar_lea.sflag [#allocation3], %s369
          %s371 = sand.u32 %s94, 1
          %s372 = smul.addr %s371, 128
          %s373 = scalar_lea.vmem [#allocation2], %s372
          %375 = dma.done %s370, 2048
        $region44: #{tpu_custom_call.1} parent=39 // pred_fallthru
          _
      $region40: #{tpu_custom_call.1} parent=5 // pred_fallthru
        _
    $region6: #{tpu_custom_call.1} parent=1 // loop_footer
      %s16 = sadd.s32 1, %s12
    $region7: #{tpu_custom_call.1} parent=1 // loop_footer_branch
      %11 = sbr.rel target = $region3
    $region8: #{tpu_custom_call.1} parent=1 // loop_exit
      _
    %376 = vsyncpa [#allocation3], 1
    %s377 = scalar_lea.sflag [#allocation3], 1
    %378 = vsyncpa %s377, 1

</llo_original>
